<compile_context>
chip_gen: v7x
topology: tpu7x:2x2x1
jax: 0.10.0
libtpu: 0.0.40
codegen_flags: <defaults>
</compile_context>

<pallas_src>
import jax
import jax.numpy as jnp
from jax.experimental import pallas as pl
from jax.experimental.pallas import tpu as pltpu


_ROWS_PER_STEP = 8                      # sublane-dense f32 row batch per step
_VMEM_BUDGET = 12 * 1024 * 1024         # per-step block budget (fits v5e's 16 MiB)


def _pick_vocab_tile(vocab, itemsize, rows_per_step=_ROWS_PER_STEP):
    """Largest lane-dense vocab tile whose per-step footprint fits the budget."""
    def step_bytes(tv):
        # out block (double-buffered) + gather scratch + bias (double-buffered)
        return tv * itemsize * (2 * rows_per_step + rows_per_step + 2)

    if step_bytes(vocab) <= _VMEM_BUDGET:
        return vocab                                    # full row: fewest steps
    if vocab % 128 == 0:
        for cand in (32768, 16384, 8192, 4096, 2048, 1024, 512, 256, 128):
            if vocab % cand == 0 and step_bytes(cand) <= _VMEM_BUDGET:
                return cand
    # TODO(synk): a huge vocab that is not a multiple of 128 cannot be tiled
    # lane-dense without masked tail tiles; fall back to the full row and let
    # the caller raise vmem_limit_bytes.
    return vocab


def _maybe_vmem_limit(params, step_bytes):
    if step_bytes > 10 * 1024 * 1024:
        params["vmem_limit_bytes"] = int(min(2 * step_bytes + (4 << 20), 60 << 20))
    return params


# ---------------------------------------------------------------------------
# Full-logits row gather: logits[r, :] = W[ids[r], :] + b
# ---------------------------------------------------------------------------
def _make_gather_kernel(rows_per_step, tile_v):
    def kernel(ids_ref, w_hbm, b_ref, out_ref, wbuf, sems):
        j = pl.program_id(0)                              # vocab tile (outer)
        i = pl.program_id(1)                              # row tile   (inner)
        v0 = pl.multiple_of(j * tile_v, tile_v)
        # Issue all R row-gather DMAs before waiting so they are in flight
        # concurrently (latency amortized over the row batch).
        for r in range(rows_per_step):
            tok = ids_ref[i * rows_per_step + r]
            pltpu.make_async_copy(
                w_hbm.at[pl.ds(tok, 1), pl.ds(v0, tile_v)],
                wbuf.at[pl.ds(r, 1)],
                sems.at[r]).start()
        for r in range(rows_per_step):
            pltpu.make_async_copy(
                w_hbm.at[pl.ds(0, 1), pl.ds(0, tile_v)],
                wbuf.at[pl.ds(r, 1)],
                sems.at[r]).wait()
        rows = wbuf[...]
        out_ref[...] = (rows + b_ref[...].astype(rows.dtype)).astype(out_ref.dtype)
    return kernel


def _gather_logit_rows(ids_flat, w, b_row, rows_per_step=_ROWS_PER_STEP):
    """Row-batched DMA gather of W rows + bias add, tiled over (rows, vocab)."""
    n_rows = ids_flat.shape[0]
    _, vocab = w.shape
    itemsize = jnp.dtype(w.dtype).itemsize
    tile_v = _pick_vocab_tile(vocab, itemsize, rows_per_step)
    n_vtiles = max(vocab // tile_v, 1)

    n_rows_pad = pl.cdiv(n_rows, rows_per_step) * rows_per_step
    if n_rows_pad != n_rows:
        ids_flat = jnp.pad(ids_flat, (0, n_rows_pad - n_rows))   # token 0: in-bounds
    n_row_tiles = n_rows_pad // rows_per_step

    grid_spec = pltpu.PrefetchScalarGridSpec(
        num_scalar_prefetch=1,
        # Vocab-tile axis outermost so the bias block index only changes
        # n_vtiles times (bias is not re-DMA'd every step).
        grid=(n_vtiles, n_row_tiles),
        in_specs=[
            pl.BlockSpec(memory_space=pl.ANY),                    # W stays in HBM
            pl.BlockSpec((1, tile_v), lambda j, i, ids: (0, j)),  # bias tile
        ],
        out_specs=pl.BlockSpec((rows_per_step, tile_v), lambda j, i, ids: (i, j)),
        scratch_shapes=[
            pltpu.VMEM((rows_per_step, tile_v), w.dtype),
            pltpu.SemaphoreType.DMA((rows_per_step,)),
        ],
    )
    step_bytes = tile_v * itemsize * (3 * rows_per_step + 2)
    params = _maybe_vmem_limit(
        dict(dimension_semantics=("parallel", "parallel")), step_bytes)

    logits = pl.pallas_call(
        _make_gather_kernel(rows_per_step, tile_v),
        out_shape=jax.ShapeDtypeStruct((n_rows_pad, vocab), w.dtype),
        grid_spec=grid_spec,
        compiler_params=pltpu.CompilerParams(**params),
    )(ids_flat.astype(jnp.int32), w, b_row)

    if n_rows_pad != n_rows:
        logits = logits[:n_rows]
    return logits


# ---------------------------------------------------------------------------
# Fused last-token path: probs = softmax(W[ids_last] + b), no logits round trip
# ---------------------------------------------------------------------------
def _make_probs_kernel(rows_per_step, vocab):
    def kernel(ids_ref, w_hbm, b_ref, out_ref, wbuf, sems):
        i = pl.program_id(0)
        for r in range(rows_per_step):
            tok = ids_ref[i * rows_per_step + r]
            pltpu.make_async_copy(
                w_hbm.at[pl.ds(tok, 1), pl.ds(0, vocab)],
                wbuf.at[pl.ds(r, 1)],
                sems.at[r]).start()
        for r in range(rows_per_step):
            pltpu.make_async_copy(
                w_hbm.at[pl.ds(0, 1), pl.ds(0, vocab)],
                wbuf.at[pl.ds(r, 1)],
                sems.at[r]).wait()
        # Numerically-stable softmax in f32 (v5e's EUP has no bf16 path).
        x = wbuf[...].astype(jnp.float32) + b_ref[...].astype(jnp.float32)
        m = jnp.max(x, axis=-1, keepdims=True)
        e = jnp.exp(x - m)
        denom = jnp.sum(e, axis=-1, keepdims=True)
        out_ref[...] = e * pl.reciprocal(denom, approx=False)
    return kernel


def _next_token_probs(ids_last, w, b_row, rows_per_step=_ROWS_PER_STEP):
    """Fused gather + bias + softmax over the last-token rows, tiled over batch."""
    batch = ids_last.shape[0]
    _, vocab = w.shape
    itemsize = jnp.dtype(w.dtype).itemsize

    b_pad = pl.cdiv(batch, rows_per_step) * rows_per_step
    if b_pad != batch:
        ids_last = jnp.pad(ids_last, (0, b_pad - batch))
    n_btiles = b_pad // rows_per_step

    grid_spec = pltpu.PrefetchScalarGridSpec(
        num_scalar_prefetch=1,
        grid=(n_btiles,),
        in_specs=[
            pl.BlockSpec(memory_space=pl.ANY),                  # W stays in HBM
            pl.BlockSpec((1, vocab), lambda i, ids: (0, 0)),    # bias resident
        ],
        out_specs=pl.BlockSpec((rows_per_step, vocab), lambda i, ids: (i, 0)),
        scratch_shapes=[
            pltpu.VMEM((rows_per_step, vocab), w.dtype),
            pltpu.SemaphoreType.DMA((rows_per_step,)),
        ],
    )
    # TODO(synk): for vocabularies too large for (8 rows x full-V) f32 blocks
    # this needs an online softmax across vocab tiles.
    step_bytes = vocab * (itemsize * rows_per_step + 4 * (2 * rows_per_step + 2))
    params = _maybe_vmem_limit(dict(dimension_semantics=("parallel",)), step_bytes)

    probs = pl.pallas_call(
        _make_probs_kernel(rows_per_step, vocab),
        out_shape=jax.ShapeDtypeStruct((b_pad, vocab), jnp.float32),
        grid_spec=grid_spec,
        compiler_params=pltpu.CompilerParams(**params),
    )(ids_last.astype(jnp.int32), w, b_row)

    if b_pad != batch:
        probs = probs[:batch]
    return probs


# ---------------------------------------------------------------------------
# Public wrapper: TFM_Base.compute_next_token_dist equivalent
# ---------------------------------------------------------------------------
def compute_next_token_dist(input_tensors, w, b, *, return_logits=True):
    """JAX/Pallas equivalent of TFM_Base.compute_next_token_dist.

    Args:
      input_tensors: float one-hot (seq_len, batch, num_categories) -- the
        module's documented input -- OR int token ids (seq_len, batch)
        (preferred: avoids streaming the one-hot slab through an argmax).
      w: stand-in head weight (num_categories, vocab), used in its native dtype.
      b: stand-in head bias (vocab,).
      return_logits: if False, only the fused last-token gather+softmax runs
        (no full (S, B, V) logits writeback).

    Returns:
      (probs, logits): probs (batch, vocab) f32 -- the Categorical(probs=...)
        parameters; logits (seq_len, batch, vocab) in w.dtype, or None.
    """
    if input_tensors.ndim == 3:
        # TODO(synk): argmax of the one-hot matches the einsum('sbc,cv') head
        # only for exact one-hot inputs (ties break to the lowest index).
        ids = jnp.argmax(input_tensors, axis=-1).astype(jnp.int32)
    else:
        ids = input_tensors.astype(jnp.int32)
    seq_len, batch = ids.shape
    vocab = w.shape[1]
    b_row = b.reshape(1, vocab)

    probs = _next_token_probs(ids[seq_len - 1], w, b_row)

    logits = None
    if return_logits:
        logits = _gather_logit_rows(ids.reshape(seq_len * batch), w, b_row)
        logits = logits.reshape(seq_len, batch, vocab)
    return probs, logits


if __name__ == "__main__":
    # Small shapes consistent with the module's (seq, batch, num_categories)
    # input; vocab chosen lane-dense (multiple of 128).
    S, B, C = 8, 2, 128
    V = 256

    key = jax.random.PRNGKey(0)
    k_tok, k_w, k_b = jax.random.split(key, 3)

    token_ids = jax.random.randint(k_tok, (S, B), 0, C, dtype=jnp.int32)
    x = jax.nn.one_hot(token_ids, C, dtype=jnp.float32)          # (S, B, C)

    # Deterministic head parameters (stand-in for the pretrained transformer).
    w = jax.random.normal(k_w, (C, V), dtype=jnp.float32) * 0.1
    b = jax.random.normal(k_b, (V,), dtype=jnp.float32) * 0.1

    probs, logits = compute_next_token_dist(x, w, b)                             # one-hot input
    probs_ids, _ = compute_next_token_dist(token_ids, w, b, return_logits=False)  # id input
    jax.block_until_ready((probs, logits, probs_ids))

    # Pure-JAX reference (one-hot matmul head + softmax of last-token logits).
    ref_logits = jnp.einsum("sbc,cv->sbv", x, w,
                            precision=jax.lax.Precision.HIGHEST) + b
    ref_probs = jax.nn.softmax(ref_logits[-1, :, :], axis=-1)

    assert logits.shape == (S, B, V)
    assert probs.shape == (B, V)
    assert jnp.allclose(logits, ref_logits, atol=1e-5, rtol=1e-5), "logits mismatch"
    assert jnp.allclose(probs, ref_probs, atol=1e-5, rtol=1e-5), "probs mismatch"
    assert jnp.allclose(probs_ids, ref_probs, atol=1e-5, rtol=1e-5), "probs-from-ids mismatch"
    assert jnp.allclose(jnp.sum(probs, axis=-1), 1.0, atol=1e-5), "probs not normalized"

    print("KERNEL_OK")
</pallas_src>

<mosaic_0001>
module attributes {stable_mosaic.version = 11 : i64} {
  func.func @kernel(%arg0: i32, %arg1: memref<8xi32, #tpu.memory_space<smem>>, %arg2: memref<128x256xf32, #tpu.memory_space<any>>, %arg3: memref<1x256xf32, #tpu.memory_space<vmem>>, %arg4: memref<8x256xf32, #tpu.memory_space<vmem>>, %arg5: memref<8x256xf32, #tpu.memory_space<vmem>>, %arg6: memref<8x!tpu.dma_semaphore, #tpu.memory_space<semaphore_mem>>) attributes {dimension_semantics = [#tpu.dimension_semantics<parallel>], iteration_bounds = array<i64: 1>, scalar_prefetch = 1 : i64, scratch_operands = 2 : i64, tpu.core_type = #tpu.core_type<tc>, window_params = [{}, {pipeline_mode = #tpu.pipeline_mode<synchronous>, transform_indices = @transform_1, window_bounds = array<i64: 1, 256>}, {transform_indices = @transform_2, window_bounds = array<i64: 8, 256>}]} {
    %c8_i32 = arith.constant 8 : i32
    %0 = arith.muli %arg0, %c8_i32 : i32
    %c0_i32 = arith.constant 0 : i32
    %1 = arith.addi %0, %c0_i32 : i32
    %2 = arith.index_cast %1 : i32 to index
    %3 = memref.load %arg1[%2] : memref<8xi32, #tpu.memory_space<smem>>
    %c0_i32_0 = arith.constant 0 : i32
    %c0_i32_1 = arith.constant 0 : i32
    %4 = tpu.memref_slice %arg2[%3, %c0_i32_1] : memref<128x256xf32, #tpu.memory_space<any>> -> memref<1x256xf32, #tpu.memory_space<any>>
    %c0_i32_2 = arith.constant 0 : i32
    %c0_i32_3 = arith.constant 0 : i32
    %5 = tpu.memref_slice %arg5[%c0_i32_2, %c0_i32_3] : memref<8x256xf32, #tpu.memory_space<vmem>> -> memref<1x256xf32, #tpu.memory_space<vmem>>
    %6 = tpu.memref_slice %arg6[%c0_i32_0] : memref<8x!tpu.dma_semaphore, #tpu.memory_space<semaphore_mem>> -> memref<1x!tpu.dma_semaphore, #tpu.memory_space<semaphore_mem>>
    %7 = tpu.memref_squeeze %6 : memref<1x!tpu.dma_semaphore, #tpu.memory_space<semaphore_mem>> -> memref<!tpu.dma_semaphore, #tpu.memory_space<semaphore_mem>>
    tpu.enqueue_dma source(%4 : memref<1x256xf32, #tpu.memory_space<any>>) target(%5 : memref<1x256xf32, #tpu.memory_space<vmem>>) target_semaphore(%7 : memref<!tpu.dma_semaphore, #tpu.memory_space<semaphore_mem>>)
    %c8_i32_4 = arith.constant 8 : i32
    %8 = arith.muli %arg0, %c8_i32_4 : i32
    %c1_i32 = arith.constant 1 : i32
    %9 = arith.addi %8, %c1_i32 : i32
    %10 = arith.index_cast %9 : i32 to index
    %11 = memref.load %arg1[%10] : memref<8xi32, #tpu.memory_space<smem>>
    %c1_i32_5 = arith.constant 1 : i32
    %c0_i32_6 = arith.constant 0 : i32
    %12 = tpu.memref_slice %arg2[%11, %c0_i32_6] : memref<128x256xf32, #tpu.memory_space<any>> -> memref<1x256xf32, #tpu.memory_space<any>>
    %c1_i32_7 = arith.constant 1 : i32
    %c0_i32_8 = arith.constant 0 : i32
    %13 = tpu.memref_slice %arg5[%c1_i32_7, %c0_i32_8] : memref<8x256xf32, #tpu.memory_space<vmem>> -> memref<1x256xf32, #tpu.memory_space<vmem>>
    %14 = tpu.memref_slice %arg6[%c1_i32_5] : memref<8x!tpu.dma_semaphore, #tpu.memory_space<semaphore_mem>> -> memref<1x!tpu.dma_semaphore, #tpu.memory_space<semaphore_mem>>
    %15 = tpu.memref_squeeze %14 : memref<1x!tpu.dma_semaphore, #tpu.memory_space<semaphore_mem>> -> memref<!tpu.dma_semaphore, #tpu.memory_space<semaphore_mem>>
    tpu.enqueue_dma source(%12 : memref<1x256xf32, #tpu.memory_space<any>>) target(%13 : memref<1x256xf32, #tpu.memory_space<vmem>>) target_semaphore(%15 : memref<!tpu.dma_semaphore, #tpu.memory_space<semaphore_mem>>)
    %c8_i32_9 = arith.constant 8 : i32
    %16 = arith.muli %arg0, %c8_i32_9 : i32
    %c2_i32 = arith.constant 2 : i32
    %17 = arith.addi %16, %c2_i32 : i32
    %18 = arith.index_cast %17 : i32 to index
    %19 = memref.load %arg1[%18] : memref<8xi32, #tpu.memory_space<smem>>
    %c2_i32_10 = arith.constant 2 : i32
    %c0_i32_11 = arith.constant 0 : i32
    %20 = tpu.memref_slice %arg2[%19, %c0_i32_11] : memref<128x256xf32, #tpu.memory_space<any>> -> memref<1x256xf32, #tpu.memory_space<any>>
    %c2_i32_12 = arith.constant 2 : i32
    %c0_i32_13 = arith.constant 0 : i32
    %21 = tpu.memref_slice %arg5[%c2_i32_12, %c0_i32_13] : memref<8x256xf32, #tpu.memory_space<vmem>> -> memref<1x256xf32, #tpu.memory_space<vmem>>
    %22 = tpu.memref_slice %arg6[%c2_i32_10] : memref<8x!tpu.dma_semaphore, #tpu.memory_space<semaphore_mem>> -> memref<1x!tpu.dma_semaphore, #tpu.memory_space<semaphore_mem>>
    %23 = tpu.memref_squeeze %22 : memref<1x!tpu.dma_semaphore, #tpu.memory_space<semaphore_mem>> -> memref<!tpu.dma_semaphore, #tpu.memory_space<semaphore_mem>>
    tpu.enqueue_dma source(%20 : memref<1x256xf32, #tpu.memory_space<any>>) target(%21 : memref<1x256xf32, #tpu.memory_space<vmem>>) target_semaphore(%23 : memref<!tpu.dma_semaphore, #tpu.memory_space<semaphore_mem>>)
    %c8_i32_14 = arith.constant 8 : i32
    %24 = arith.muli %arg0, %c8_i32_14 : i32
    %c3_i32 = arith.constant 3 : i32
    %25 = arith.addi %24, %c3_i32 : i32
    %26 = arith.index_cast %25 : i32 to index
    %27 = memref.load %arg1[%26] : memref<8xi32, #tpu.memory_space<smem>>
    %c3_i32_15 = arith.constant 3 : i32
    %c0_i32_16 = arith.constant 0 : i32
    %28 = tpu.memref_slice %arg2[%27, %c0_i32_16] : memref<128x256xf32, #tpu.memory_space<any>> -> memref<1x256xf32, #tpu.memory_space<any>>
    %c3_i32_17 = arith.constant 3 : i32
    %c0_i32_18 = arith.constant 0 : i32
    %29 = tpu.memref_slice %arg5[%c3_i32_17, %c0_i32_18] : memref<8x256xf32, #tpu.memory_space<vmem>> -> memref<1x256xf32, #tpu.memory_space<vmem>>
    %30 = tpu.memref_slice %arg6[%c3_i32_15] : memref<8x!tpu.dma_semaphore, #tpu.memory_space<semaphore_mem>> -> memref<1x!tpu.dma_semaphore, #tpu.memory_space<semaphore_mem>>
    %31 = tpu.memref_squeeze %30 : memref<1x!tpu.dma_semaphore, #tpu.memory_space<semaphore_mem>> -> memref<!tpu.dma_semaphore, #tpu.memory_space<semaphore_mem>>
    tpu.enqueue_dma source(%28 : memref<1x256xf32, #tpu.memory_space<any>>) target(%29 : memref<1x256xf32, #tpu.memory_space<vmem>>) target_semaphore(%31 : memref<!tpu.dma_semaphore, #tpu.memory_space<semaphore_mem>>)
    %c8_i32_19 = arith.constant 8 : i32
    %32 = arith.muli %arg0, %c8_i32_19 : i32
    %c4_i32 = arith.constant 4 : i32
    %33 = arith.addi %32, %c4_i32 : i32
    %34 = arith.index_cast %33 : i32 to index
    %35 = memref.load %arg1[%34] : memref<8xi32, #tpu.memory_space<smem>>
    %c4_i32_20 = arith.constant 4 : i32
    %c0_i32_21 = arith.constant 0 : i32
    %36 = tpu.memref_slice %arg2[%35, %c0_i32_21] : memref<128x256xf32, #tpu.memory_space<any>> -> memref<1x256xf32, #tpu.memory_space<any>>
    %c4_i32_22 = arith.constant 4 : i32
    %c0_i32_23 = arith.constant 0 : i32
    %37 = tpu.memref_slice %arg5[%c4_i32_22, %c0_i32_23] : memref<8x256xf32, #tpu.memory_space<vmem>> -> memref<1x256xf32, #tpu.memory_space<vmem>>
    %38 = tpu.memref_slice %arg6[%c4_i32_20] : memref<8x!tpu.dma_semaphore, #tpu.memory_space<semaphore_mem>> -> memref<1x!tpu.dma_semaphore, #tpu.memory_space<semaphore_mem>>
    %39 = tpu.memref_squeeze %38 : memref<1x!tpu.dma_semaphore, #tpu.memory_space<semaphore_mem>> -> memref<!tpu.dma_semaphore, #tpu.memory_space<semaphore_mem>>
    tpu.enqueue_dma source(%36 : memref<1x256xf32, #tpu.memory_space<any>>) target(%37 : memref<1x256xf32, #tpu.memory_space<vmem>>) target_semaphore(%39 : memref<!tpu.dma_semaphore, #tpu.memory_space<semaphore_mem>>)
    %c8_i32_24 = arith.constant 8 : i32
    %40 = arith.muli %arg0, %c8_i32_24 : i32
    %c5_i32 = arith.constant 5 : i32
    %41 = arith.addi %40, %c5_i32 : i32
    %42 = arith.index_cast %41 : i32 to index
    %43 = memref.load %arg1[%42] : memref<8xi32, #tpu.memory_space<smem>>
    %c5_i32_25 = arith.constant 5 : i32
    %c0_i32_26 = arith.constant 0 : i32
    %44 = tpu.memref_slice %arg2[%43, %c0_i32_26] : memref<128x256xf32, #tpu.memory_space<any>> -> memref<1x256xf32, #tpu.memory_space<any>>
    %c5_i32_27 = arith.constant 5 : i32
    %c0_i32_28 = arith.constant 0 : i32
    %45 = tpu.memref_slice %arg5[%c5_i32_27, %c0_i32_28] : memref<8x256xf32, #tpu.memory_space<vmem>> -> memref<1x256xf32, #tpu.memory_space<vmem>>
    %46 = tpu.memref_slice %arg6[%c5_i32_25] : memref<8x!tpu.dma_semaphore, #tpu.memory_space<semaphore_mem>> -> memref<1x!tpu.dma_semaphore, #tpu.memory_space<semaphore_mem>>
    %47 = tpu.memref_squeeze %46 : memref<1x!tpu.dma_semaphore, #tpu.memory_space<semaphore_mem>> -> memref<!tpu.dma_semaphore, #tpu.memory_space<semaphore_mem>>
    tpu.enqueue_dma source(%44 : memref<1x256xf32, #tpu.memory_space<any>>) target(%45 : memref<1x256xf32, #tpu.memory_space<vmem>>) target_semaphore(%47 : memref<!tpu.dma_semaphore, #tpu.memory_space<semaphore_mem>>)
    %c8_i32_29 = arith.constant 8 : i32
    %48 = arith.muli %arg0, %c8_i32_29 : i32
    %c6_i32 = arith.constant 6 : i32
    %49 = arith.addi %48, %c6_i32 : i32
    %50 = arith.index_cast %49 : i32 to index
    %51 = memref.load %arg1[%50] : memref<8xi32, #tpu.memory_space<smem>>
    %c6_i32_30 = arith.constant 6 : i32
    %c0_i32_31 = arith.constant 0 : i32
    %52 = tpu.memref_slice %arg2[%51, %c0_i32_31] : memref<128x256xf32, #tpu.memory_space<any>> -> memref<1x256xf32, #tpu.memory_space<any>>
    %c6_i32_32 = arith.constant 6 : i32
    %c0_i32_33 = arith.constant 0 : i32
    %53 = tpu.memref_slice %arg5[%c6_i32_32, %c0_i32_33] : memref<8x256xf32, #tpu.memory_space<vmem>> -> memref<1x256xf32, #tpu.memory_space<vmem>>
    %54 = tpu.memref_slice %arg6[%c6_i32_30] : memref<8x!tpu.dma_semaphore, #tpu.memory_space<semaphore_mem>> -> memref<1x!tpu.dma_semaphore, #tpu.memory_space<semaphore_mem>>
    %55 = tpu.memref_squeeze %54 : memref<1x!tpu.dma_semaphore, #tpu.memory_space<semaphore_mem>> -> memref<!tpu.dma_semaphore, #tpu.memory_space<semaphore_mem>>
    tpu.enqueue_dma source(%52 : memref<1x256xf32, #tpu.memory_space<any>>) target(%53 : memref<1x256xf32, #tpu.memory_space<vmem>>) target_semaphore(%55 : memref<!tpu.dma_semaphore, #tpu.memory_space<semaphore_mem>>)
    %c8_i32_34 = arith.constant 8 : i32
    %56 = arith.muli %arg0, %c8_i32_34 : i32
    %c7_i32 = arith.constant 7 : i32
    %57 = arith.addi %56, %c7_i32 : i32
    %58 = arith.index_cast %57 : i32 to index
    %59 = memref.load %arg1[%58] : memref<8xi32, #tpu.memory_space<smem>>
    %c7_i32_35 = arith.constant 7 : i32
    %c0_i32_36 = arith.constant 0 : i32
    %60 = tpu.memref_slice %arg2[%59, %c0_i32_36] : memref<128x256xf32, #tpu.memory_space<any>> -> memref<1x256xf32, #tpu.memory_space<any>>
    %c7_i32_37 = arith.constant 7 : i32
    %c0_i32_38 = arith.constant 0 : i32
    %61 = tpu.memref_slice %arg5[%c7_i32_37, %c0_i32_38] : memref<8x256xf32, #tpu.memory_space<vmem>> -> memref<1x256xf32, #tpu.memory_space<vmem>>
    %62 = tpu.memref_slice %arg6[%c7_i32_35] : memref<8x!tpu.dma_semaphore, #tpu.memory_space<semaphore_mem>> -> memref<1x!tpu.dma_semaphore, #tpu.memory_space<semaphore_mem>>
    %63 = tpu.memref_squeeze %62 : memref<1x!tpu.dma_semaphore, #tpu.memory_space<semaphore_mem>> -> memref<!tpu.dma_semaphore, #tpu.memory_space<semaphore_mem>>
    tpu.enqueue_dma source(%60 : memref<1x256xf32, #tpu.memory_space<any>>) target(%61 : memref<1x256xf32, #tpu.memory_space<vmem>>) target_semaphore(%63 : memref<!tpu.dma_semaphore, #tpu.memory_space<semaphore_mem>>)
    %c0_i32_39 = arith.constant 0 : i32
    %c0_i32_40 = arith.constant 0 : i32
    %c0_i32_41 = arith.constant 0 : i32
    %64 = tpu.memref_slice %arg2[%c0_i32_40, %c0_i32_41] : memref<128x256xf32, #tpu.memory_space<any>> -> memref<1x256xf32, #tpu.memory_space<any>>
    %c0_i32_42 = arith.constant 0 : i32
    %c0_i32_43 = arith.constant 0 : i32
    %65 = tpu.memref_slice %arg5[%c0_i32_42, %c0_i32_43] : memref<8x256xf32, #tpu.memory_space<vmem>> -> memref<1x256xf32, #tpu.memory_space<vmem>>
    %66 = tpu.memref_slice %arg6[%c0_i32_39] : memref<8x!tpu.dma_semaphore, #tpu.memory_space<semaphore_mem>> -> memref<1x!tpu.dma_semaphore, #tpu.memory_space<semaphore_mem>>
    %67 = tpu.memref_squeeze %66 : memref<1x!tpu.dma_semaphore, #tpu.memory_space<semaphore_mem>> -> memref<!tpu.dma_semaphore, #tpu.memory_space<semaphore_mem>>
    tpu.wait_dma2 semaphore(%67 : memref<!tpu.dma_semaphore, #tpu.memory_space<semaphore_mem>>) src(%64 : memref<1x256xf32, #tpu.memory_space<any>>) dst(%65 : memref<1x256xf32, #tpu.memory_space<vmem>>)
    %c1_i32_44 = arith.constant 1 : i32
    %c0_i32_45 = arith.constant 0 : i32
    %c0_i32_46 = arith.constant 0 : i32
    %68 = tpu.memref_slice %arg2[%c0_i32_45, %c0_i32_46] : memref<128x256xf32, #tpu.memory_space<any>> -> memref<1x256xf32, #tpu.memory_space<any>>
    %c1_i32_47 = arith.constant 1 : i32
    %c0_i32_48 = arith.constant 0 : i32
    %69 = tpu.memref_slice %arg5[%c1_i32_47, %c0_i32_48] : memref<8x256xf32, #tpu.memory_space<vmem>> -> memref<1x256xf32, #tpu.memory_space<vmem>>
    %70 = tpu.memref_slice %arg6[%c1_i32_44] : memref<8x!tpu.dma_semaphore, #tpu.memory_space<semaphore_mem>> -> memref<1x!tpu.dma_semaphore, #tpu.memory_space<semaphore_mem>>
    %71 = tpu.memref_squeeze %70 : memref<1x!tpu.dma_semaphore, #tpu.memory_space<semaphore_mem>> -> memref<!tpu.dma_semaphore, #tpu.memory_space<semaphore_mem>>
    tpu.wait_dma2 semaphore(%71 : memref<!tpu.dma_semaphore, #tpu.memory_space<semaphore_mem>>) src(%68 : memref<1x256xf32, #tpu.memory_space<any>>) dst(%69 : memref<1x256xf32, #tpu.memory_space<vmem>>)
    %c2_i32_49 = arith.constant 2 : i32
    %c0_i32_50 = arith.constant 0 : i32
    %c0_i32_51 = arith.constant 0 : i32
    %72 = tpu.memref_slice %arg2[%c0_i32_50, %c0_i32_51] : memref<128x256xf32, #tpu.memory_space<any>> -> memref<1x256xf32, #tpu.memory_space<any>>
    %c2_i32_52 = arith.constant 2 : i32
    %c0_i32_53 = arith.constant 0 : i32
    %73 = tpu.memref_slice %arg5[%c2_i32_52, %c0_i32_53] : memref<8x256xf32, #tpu.memory_space<vmem>> -> memref<1x256xf32, #tpu.memory_space<vmem>>
    %74 = tpu.memref_slice %arg6[%c2_i32_49] : memref<8x!tpu.dma_semaphore, #tpu.memory_space<semaphore_mem>> -> memref<1x!tpu.dma_semaphore, #tpu.memory_space<semaphore_mem>>
    %75 = tpu.memref_squeeze %74 : memref<1x!tpu.dma_semaphore, #tpu.memory_space<semaphore_mem>> -> memref<!tpu.dma_semaphore, #tpu.memory_space<semaphore_mem>>
    tpu.wait_dma2 semaphore(%75 : memref<!tpu.dma_semaphore, #tpu.memory_space<semaphore_mem>>) src(%72 : memref<1x256xf32, #tpu.memory_space<any>>) dst(%73 : memref<1x256xf32, #tpu.memory_space<vmem>>)
    %c3_i32_54 = arith.constant 3 : i32
    %c0_i32_55 = arith.constant 0 : i32
    %c0_i32_56 = arith.constant 0 : i32
    %76 = tpu.memref_slice %arg2[%c0_i32_55, %c0_i32_56] : memref<128x256xf32, #tpu.memory_space<any>> -> memref<1x256xf32, #tpu.memory_space<any>>
    %c3_i32_57 = arith.constant 3 : i32
    %c0_i32_58 = arith.constant 0 : i32
    %77 = tpu.memref_slice %arg5[%c3_i32_57, %c0_i32_58] : memref<8x256xf32, #tpu.memory_space<vmem>> -> memref<1x256xf32, #tpu.memory_space<vmem>>
    %78 = tpu.memref_slice %arg6[%c3_i32_54] : memref<8x!tpu.dma_semaphore, #tpu.memory_space<semaphore_mem>> -> memref<1x!tpu.dma_semaphore, #tpu.memory_space<semaphore_mem>>
    %79 = tpu.memref_squeeze %78 : memref<1x!tpu.dma_semaphore, #tpu.memory_space<semaphore_mem>> -> memref<!tpu.dma_semaphore, #tpu.memory_space<semaphore_mem>>
    tpu.wait_dma2 semaphore(%79 : memref<!tpu.dma_semaphore, #tpu.memory_space<semaphore_mem>>) src(%76 : memref<1x256xf32, #tpu.memory_space<any>>) dst(%77 : memref<1x256xf32, #tpu.memory_space<vmem>>)
    %c4_i32_59 = arith.constant 4 : i32
    %c0_i32_60 = arith.constant 0 : i32
    %c0_i32_61 = arith.constant 0 : i32
    %80 = tpu.memref_slice %arg2[%c0_i32_60, %c0_i32_61] : memref<128x256xf32, #tpu.memory_space<any>> -> memref<1x256xf32, #tpu.memory_space<any>>
    %c4_i32_62 = arith.constant 4 : i32
    %c0_i32_63 = arith.constant 0 : i32
    %81 = tpu.memref_slice %arg5[%c4_i32_62, %c0_i32_63] : memref<8x256xf32, #tpu.memory_space<vmem>> -> memref<1x256xf32, #tpu.memory_space<vmem>>
    %82 = tpu.memref_slice %arg6[%c4_i32_59] : memref<8x!tpu.dma_semaphore, #tpu.memory_space<semaphore_mem>> -> memref<1x!tpu.dma_semaphore, #tpu.memory_space<semaphore_mem>>
    %83 = tpu.memref_squeeze %82 : memref<1x!tpu.dma_semaphore, #tpu.memory_space<semaphore_mem>> -> memref<!tpu.dma_semaphore, #tpu.memory_space<semaphore_mem>>
    tpu.wait_dma2 semaphore(%83 : memref<!tpu.dma_semaphore, #tpu.memory_space<semaphore_mem>>) src(%80 : memref<1x256xf32, #tpu.memory_space<any>>) dst(%81 : memref<1x256xf32, #tpu.memory_space<vmem>>)
    %c5_i32_64 = arith.constant 5 : i32
    %c0_i32_65 = arith.constant 0 : i32
    %c0_i32_66 = arith.constant 0 : i32
    %84 = tpu.memref_slice %arg2[%c0_i32_65, %c0_i32_66] : memref<128x256xf32, #tpu.memory_space<any>> -> memref<1x256xf32, #tpu.memory_space<any>>
    %c5_i32_67 = arith.constant 5 : i32
    %c0_i32_68 = arith.constant 0 : i32
    %85 = tpu.memref_slice %arg5[%c5_i32_67, %c0_i32_68] : memref<8x256xf32, #tpu.memory_space<vmem>> -> memref<1x256xf32, #tpu.memory_space<vmem>>
    %86 = tpu.memref_slice %arg6[%c5_i32_64] : memref<8x!tpu.dma_semaphore, #tpu.memory_space<semaphore_mem>> -> memref<1x!tpu.dma_semaphore, #tpu.memory_space<semaphore_mem>>
    %87 = tpu.memref_squeeze %86 : memref<1x!tpu.dma_semaphore, #tpu.memory_space<semaphore_mem>> -> memref<!tpu.dma_semaphore, #tpu.memory_space<semaphore_mem>>
    tpu.wait_dma2 semaphore(%87 : memref<!tpu.dma_semaphore, #tpu.memory_space<semaphore_mem>>) src(%84 : memref<1x256xf32, #tpu.memory_space<any>>) dst(%85 : memref<1x256xf32, #tpu.memory_space<vmem>>)
    %c6_i32_69 = arith.constant 6 : i32
    %c0_i32_70 = arith.constant 0 : i32
    %c0_i32_71 = arith.constant 0 : i32
    %88 = tpu.memref_slice %arg2[%c0_i32_70, %c0_i32_71] : memref<128x256xf32, #tpu.memory_space<any>> -> memref<1x256xf32, #tpu.memory_space<any>>
    %c6_i32_72 = arith.constant 6 : i32
    %c0_i32_73 = arith.constant 0 : i32
    %89 = tpu.memref_slice %arg5[%c6_i32_72, %c0_i32_73] : memref<8x256xf32, #tpu.memory_space<vmem>> -> memref<1x256xf32, #tpu.memory_space<vmem>>
    %90 = tpu.memref_slice %arg6[%c6_i32_69] : memref<8x!tpu.dma_semaphore, #tpu.memory_space<semaphore_mem>> -> memref<1x!tpu.dma_semaphore, #tpu.memory_space<semaphore_mem>>
    %91 = tpu.memref_squeeze %90 : memref<1x!tpu.dma_semaphore, #tpu.memory_space<semaphore_mem>> -> memref<!tpu.dma_semaphore, #tpu.memory_space<semaphore_mem>>
    tpu.wait_dma2 semaphore(%91 : memref<!tpu.dma_semaphore, #tpu.memory_space<semaphore_mem>>) src(%88 : memref<1x256xf32, #tpu.memory_space<any>>) dst(%89 : memref<1x256xf32, #tpu.memory_space<vmem>>)
    %c7_i32_74 = arith.constant 7 : i32
    %c0_i32_75 = arith.constant 0 : i32
    %c0_i32_76 = arith.constant 0 : i32
    %92 = tpu.memref_slice %arg2[%c0_i32_75, %c0_i32_76] : memref<128x256xf32, #tpu.memory_space<any>> -> memref<1x256xf32, #tpu.memory_space<any>>
    %c7_i32_77 = arith.constant 7 : i32
    %c0_i32_78 = arith.constant 0 : i32
    %93 = tpu.memref_slice %arg5[%c7_i32_77, %c0_i32_78] : memref<8x256xf32, #tpu.memory_space<vmem>> -> memref<1x256xf32, #tpu.memory_space<vmem>>
    %94 = tpu.memref_slice %arg6[%c7_i32_74] : memref<8x!tpu.dma_semaphore, #tpu.memory_space<semaphore_mem>> -> memref<1x!tpu.dma_semaphore, #tpu.memory_space<semaphore_mem>>
    %95 = tpu.memref_squeeze %94 : memref<1x!tpu.dma_semaphore, #tpu.memory_space<semaphore_mem>> -> memref<!tpu.dma_semaphore, #tpu.memory_space<semaphore_mem>>
    tpu.wait_dma2 semaphore(%95 : memref<!tpu.dma_semaphore, #tpu.memory_space<semaphore_mem>>) src(%92 : memref<1x256xf32, #tpu.memory_space<any>>) dst(%93 : memref<1x256xf32, #tpu.memory_space<vmem>>)
    %c0 = arith.constant 0 : index
    %c0_79 = arith.constant 0 : index
    %96 = vector.load %arg5[%c0, %c0_79] : memref<8x256xf32, #tpu.memory_space<vmem>>, vector<8x256xf32>
    %c0_80 = arith.constant 0 : index
    %c0_81 = arith.constant 0 : index
    %97 = vector.load %arg3[%c0_80, %c0_81] : memref<1x256xf32, #tpu.memory_space<vmem>>, vector<1x256xf32>
    %98 = vector.broadcast %97 : vector<1x256xf32> to vector<8x256xf32>
    %99 = arith.addf %96, %98 : vector<8x256xf32>
    %cst = arith.constant dense<0xFF800000> : vector<8xf32>
    %100 = vector.multi_reduction <maximumf>, %99, %cst [1] : vector<8x256xf32> to vector<8xf32>
    %101 = vector.shape_cast %100 : vector<8xf32> to vector<8x1xf32>
    %102 = vector.broadcast %101 : vector<8x1xf32> to vector<8x256xf32>
    %103 = arith.subf %99, %102 : vector<8x256xf32>
    %104 = math.exp %103 : vector<8x256xf32>
    %cst_82 = arith.constant dense<0.000000e+00> : vector<8xf32>
    %105 = vector.multi_reduction <add>, %104, %cst_82 [1] : vector<8x256xf32> to vector<8xf32>
    %106 = vector.shape_cast %105 : vector<8xf32> to vector<8x1xf32>
    %107 = tpu.reciprocal %106 : vector<8x1xf32> -> vector<8x1xf32>
    %108 = vector.broadcast %107 : vector<8x1xf32> to vector<8x256xf32>
    %109 = arith.mulf %104, %108 : vector<8x256xf32>
    %c0_83 = arith.constant 0 : index
    %c0_84 = arith.constant 0 : index
    %110 = vector.load %arg4[%c0_83, %c0_84] : memref<8x256xf32, #tpu.memory_space<vmem>>, vector<8x256xf32>
    tpu.vector_store %arg4[%c0_83, %c0_84], %109 {strides = array<i32>} : memref<8x256xf32, #tpu.memory_space<vmem>>, vector<8x256xf32>,
    return
  }
  func.func @transform_1(%arg0: i32, %arg1: memref<8xi32, #tpu.memory_space<smem>>) -> (i32, i32) {
    %c0_i32 = arith.constant 0 : i32
    %c0_i32_0 = arith.constant 0 : i32
    %c0_i32_1 = arith.constant 0 : i32
    return %c0_i32, %c0_i32_0 : i32, i32
  }
  func.func @transform_2(%arg0: i32, %arg1: memref<8xi32, #tpu.memory_space<smem>>) -> (i32, i32) {
    %c0_i32 = arith.constant 0 : i32
    %c0_i32_0 = arith.constant 0 : i32
    return %arg0, %c0_i32 : i32, i32
  }
}

</mosaic_0001>

<llo_original>
// kernel: tpu_custom_call.1
$region0: #{tpu_custom_call.1}
  #allocation0 [shape = 'u32[]', space=smem, size = 0x4, offset = 0x4, fixed_abs, tag = 'smem constant byte address 0x4 - core index']
  #allocation1 [shape = 'u32[144,128]{1,0:T(1,128)}', space=vmem, size = 0x12000, scoped, tag = 'internal scratch']
  #allocation2 [shape = 'f32[8,256]{1,0:T(8,128)}', space=vmem, size = 0x2000, scoped, tag = 'scratch operand']
  #allocation3 [shape = 's32[8]{0}', space=sflag, size = 0x20, scoped, tag = 'scratch operand']
  #allocation4 [shape = 's32[1]{0}', space=sflag, size = 0x4, scoped, tag = 'scoped memory for tpu_custom_call.1']
  #allocation5 [shape = 'u8[512]{0}', space=smem, size = 0x200, scoped, tag = 'prefetched SMEM operand 0']
  #allocation8 [shape = 's32[]', space=sflag, size = 0x4, offset = 0, fixed_abs, tag = 'sflag constant byte address 0x0 - dummy sync flag']
  #allocation9 [shape = 's32[]', space=sflag, size = 0x4, offset = 0, fixed_abs, tag = 'sflag constant byte address 0x0 - dummy sync flag']
  #allocation10 [shape = 's32[]', space=sflag, size = 0x4, offset = 0, fixed_abs, tag = 'sflag constant byte address 0x0 - dummy sync flag']
  #allocation11 [shape = 's32[]', space=sflag, size = 0x4, offset = 0, fixed_abs, tag = 'sflag constant byte address 0x0 - dummy sync flag']
  #allocation12 [shape = 's32[]', space=sflag, size = 0x4, offset = 0, fixed_abs, tag = 'sflag constant byte address 0x0 - dummy sync flag']
  #allocation13 [shape = 's32[]', space=sflag, size = 0x4, offset = 0, fixed_abs, tag = 'sflag constant byte address 0x0 - dummy sync flag']
  #allocation14 [shape = 's32[]', space=sflag, size = 0x4, offset = 0, fixed_abs, tag = 'sflag constant byte address 0x0 - dummy sync flag']
  #allocation15 [shape = 's32[]', space=sflag, size = 0x4, offset = 0, fixed_abs, tag = 'sflag constant byte address 0x0 - dummy sync flag']
  %s0 = inlined_call_operand.hbm [shape: s32[8], index: 0, kind: input, shape index: {}]
  %s1 = inlined_call_operand.hbm [shape: f32[128,256], index: 1, kind: input, shape index: {}]
  %s2 = inlined_call_operand.vmem [shape: f32[1,256], index: 2, kind: input, shape index: {}]
  %s3 = inlined_call_operand.hbm [shape: f32[8,256], index: 3, kind: output, shape index: {}]
  %s4 = sld [smem:[#allocation0]]
  $region14: #{tpu_custom_call.1} parent=0
    _
  %s6 = ssub.s32 1, %s4
  %s7 = scalar_select 0, %s6, %s4
  %9 = dma.hbm_to_smem %s0, 16, [#allocation5], [#allocation4]
  %10 = dma.done [#allocation4], 16
  %11 = sfence
  $region1: #{tpu_custom_call.1} parent=0
    #allocation6 [shape = 'u8[8192]{0}', space=vmem, size = 0x2000, scoped, tag = 'output window, operand 0, single buffered']
    #allocation7 [shape = 's32[1]{0}', space=sflag, size = 0x4, scoped, tag = 'scoped memory for tpu_custom_call.1']
    %12 = vsyncpa [#allocation7], 0
    // Predicated region
    $region2: #{tpu_custom_call.1} parent=1 // pred_check
      _
    $region3: #{tpu_custom_call.1} parent=1 // pred_check_branch
      %14 = sbr.rel (0) target = $region5
    $region4: #{tpu_custom_call.1} parent=1 // pred_region
      _
    $region5: #{tpu_custom_call.1} parent=1 // pred_fallthru
      _
    %s15 = smul.u32 0, 8
    %s16 = sld [smem:[#allocation5 + %s15]]
    %s17 = sshrl.u32 %s16, 3
    %s18 = sand.u32 %s16, 7
    %s19 = smul.u32 %s17, 16
    %s20 = sadd.s32 %s18, %s19
    %s21 = smul.addr %s20, 16
    %s22 = scalar_lea.hbm %s1, %s21
    %s24 = sshll.u32 [#allocation2], 4
    %s25 = int_to_ptr.vmem [resolvable:$true] %s24
    %27 = dma.hbm_to_vmem [thread:$0]  %s22, 32, %s25, [#allocation3], 128, 128, 1
    %s28 = sadd.s32 %s15, 1
    %s29 = sld [smem:[#allocation5 + %s28]]
    %s30 = sshrl.u32 %s29, 3
    %s31 = sand.u32 %s29, 7
    %s32 = smul.u32 %s30, 16
    %s33 = sadd.s32 %s31, %s32
    %s34 = smul.addr %s33, 16
    %s35 = scalar_lea.hbm %s1, %s34
    %s36 = scalar_lea.vmem [#allocation2], 1
    %s37 = scalar_lea.sflag [#allocation3], 1
    %s39 = sshll.u32 %s36, 4
    %s40 = int_to_ptr.vmem [resolvable:$true] %s39
    %42 = dma.hbm_to_vmem [thread:$0]  %s35, 32, %s40, %s37, 128, 128, 1
    %s43 = sadd.s32 %s15, 2
    %s44 = sld [smem:[#allocation5 + %s43]]
    %s45 = sshrl.u32 %s44, 3
    %s46 = sand.u32 %s44, 7
    %s47 = smul.u32 %s45, 16
    %s48 = sadd.s32 %s46, %s47
    %s49 = smul.addr %s48, 16
    %s50 = scalar_lea.hbm %s1, %s49
    %s51 = scalar_lea.vmem [#allocation2], 2
    %s52 = scalar_lea.sflag [#allocation3], 2
    %s54 = sshll.u32 %s51, 4
    %s55 = int_to_ptr.vmem [resolvable:$true] %s54
    %57 = dma.hbm_to_vmem [thread:$0]  %s50, 32, %s55, %s52, 128, 128, 1
    %s58 = sadd.s32 %s15, 3
    %s59 = sld [smem:[#allocation5 + %s58]]
    %s60 = sshrl.u32 %s59, 3
    %s61 = sand.u32 %s59, 7
    %s62 = smul.u32 %s60, 16
    %s63 = sadd.s32 %s61, %s62
    %s64 = smul.addr %s63, 16
    %s65 = scalar_lea.hbm %s1, %s64
    %s66 = scalar_lea.vmem [#allocation2], 3
    %s67 = scalar_lea.sflag [#allocation3], 3
    %s69 = sshll.u32 %s66, 4
    %s70 = int_to_ptr.vmem [resolvable:$true] %s69
    %72 = dma.hbm_to_vmem [thread:$0]  %s65, 32, %s70, %s67, 128, 128, 1
    %s73 = sadd.s32 %s15, 4
    %s74 = sld [smem:[#allocation5 + %s73]]
    %s75 = sshrl.u32 %s74, 3
    %s76 = sand.u32 %s74, 7
    %s77 = smul.u32 %s75, 16
    %s78 = sadd.s32 %s76, %s77
    %s79 = smul.addr %s78, 16
    %s80 = scalar_lea.hbm %s1, %s79
    %s81 = scalar_lea.vmem [#allocation2], 4
    %s82 = scalar_lea.sflag [#allocation3], 4
    %s84 = sshll.u32 %s81, 4
    %s85 = int_to_ptr.vmem [resolvable:$true] %s84
    %87 = dma.hbm_to_vmem [thread:$0]  %s80, 32, %s85, %s82, 128, 128, 1
    %s88 = sadd.s32 %s15, 5
    %s89 = sld [smem:[#allocation5 + %s88]]
    %s90 = sshrl.u32 %s89, 3
    %s91 = sand.u32 %s89, 7
    %s92 = smul.u32 %s90, 16
    %s93 = sadd.s32 %s91, %s92
    %s94 = smul.addr %s93, 16
    %s95 = scalar_lea.hbm %s1, %s94
    %s96 = scalar_lea.vmem [#allocation2], 5
    %s97 = scalar_lea.sflag [#allocation3], 5
    %s99 = sshll.u32 %s96, 4
    %s100 = int_to_ptr.vmem [resolvable:$true] %s99
    %102 = dma.hbm_to_vmem [thread:$0]  %s95, 32, %s100, %s97, 128, 128, 1
    %s103 = sadd.s32 %s15, 6
    %s104 = sld [smem:[#allocation5 + %s103]]
    %s105 = sshrl.u32 %s104, 3
    %s106 = sand.u32 %s104, 7
    %s107 = smul.u32 %s105, 16
    %s108 = sadd.s32 %s106, %s107
    %s109 = smul.addr %s108, 16
    %s110 = scalar_lea.hbm %s1, %s109
    %s111 = scalar_lea.vmem [#allocation2], 6
    %s112 = scalar_lea.sflag [#allocation3], 6
    %s114 = sshll.u32 %s111, 4
    %s115 = int_to_ptr.vmem [resolvable:$true] %s114
    %117 = dma.hbm_to_vmem [thread:$0]  %s110, 32, %s115, %s112, 128, 128, 1
    %s118 = sadd.s32 %s15, 7
    %s119 = sld [smem:[#allocation5 + %s118]]
    %s120 = sshrl.u32 %s119, 3
    %s121 = sand.u32 %s119, 7
    %s122 = smul.u32 %s120, 16
    %s123 = sadd.s32 %s121, %s122
    %s124 = smul.addr %s123, 16
    %s125 = scalar_lea.hbm %s1, %s124
    %s126 = scalar_lea.vmem [#allocation2], 7
    %s127 = scalar_lea.sflag [#allocation3], 7
    %s129 = sshll.u32 %s126, 4
    %s130 = int_to_ptr.vmem [resolvable:$true] %s129
    %132 = dma.hbm_to_vmem [thread:$0]  %s125, 32, %s130, %s127, 128, 128, 1
    %s133 = smul.u32 1, 2
    %s134 = sshll.u32 %s133, 4
    %135 = dma.done [#allocation3], %s134
    %s136 = sshll.u32 %s133, 4
    %137 = dma.done %s37, %s136
    %s138 = sshll.u32 %s133, 4
    %139 = dma.done %s52, %s138
    %s140 = sshll.u32 %s133, 4
    %141 = dma.done %s67, %s140
    %s142 = sshll.u32 %s133, 4
    %143 = dma.done %s82, %s142
    %s144 = sshll.u32 %s133, 4
    %145 = dma.done %s97, %s144
    %s146 = sshll.u32 %s133, 4
    %147 = dma.done %s112, %s146
    %s148 = sshll.u32 %s133, 4
    %149 = dma.done %s127, %s148
    %v150 = vld [vmem:[#allocation2] sm:$0xff]
    %v151 = vld [vmem:[#allocation2 + $0x8] sm:$0xff]
    %v152 = vld [vmem:[%s2] sm:$0x3]
    %v154 = vlaneseq
    %v155 = vshrl.u32 %v154, 7
    %v156 = vsub.s32 0, %v155
    %v157 = vrot.slane %v152, %v156
    %v158 = vlaneseq
    %v159 = vshrl.u32 %v158, 7
    %v160 = vsub.s32 1, %v159
    %v161 = vrot.slane %v152, %v160
    %v164 = vadd.f32 %v150, %v157
    %v165 = vadd.f32 %v151, %v161
    %v166 = vmax.f32 %v164, %v165
    %167 = vmax.xlane.f32.xlu0 %v166
    %v168 = vpop.xlane.xlu0 %167
    %v169 = vsub.f32 %v164, %v168
    %v170 = vsub.f32 %v165, %v168
    %v171 = vmul.f32 %v169, 1.442695
    %v172 = vpow.pop %v171
    %v173 = vmul.f32 %v170, 1.442695
    %v174 = vpow.pop %v173
    %v175 = vadd.f32 %v172, %v174
    %176 = vadd.xlane.f32.xlu0 %v175
    %v177 = vpop.xlane.xlu0 %176
    %v178 = vrcp.pop %v177
    %v179 = vmul.f32 %v172, %v178
    %v180 = vmul.f32 %v174, %v178
    %181 = vst [vmem:[#allocation6] sm:$0xff] %v179
    %182 = vst [vmem:[#allocation6 + $0x8] sm:$0xff] %v180
    // Predicated region
    $region6: #{tpu_custom_call.1} parent=1 // pred_check
      _
    $region7: #{tpu_custom_call.1} parent=1 // pred_check_branch
      %184 = sbr.rel (0) target = $region9
    $region8: #{tpu_custom_call.1} parent=1 // pred_region
      %s186 = ssub.s32 256, 256
      %187 = vsyncadd [#allocation7], %s186
      %s189 = sshll.u32 [#allocation6], 4
      %s190 = int_to_ptr.vmem [resolvable:$true] %s189
      %192 = dma.vmem_to_hbm [thread:$0]  %s190, 256, %s3, [#allocation7]
    $region9: #{tpu_custom_call.1} parent=1 // pred_fallthru
      _
    // Predicated region
    $region10: #{tpu_custom_call.1} parent=1 // pred_check
      _
    $region11: #{tpu_custom_call.1} parent=1 // pred_check_branch
      %194 = sbr.rel (0) target = $region13
    $region12: #{tpu_custom_call.1} parent=1 // pred_region
      %195 = dma.done [#allocation7], 256
    $region13: #{tpu_custom_call.1} parent=1 // pred_fallthru
      _
    %196 = vsyncpa [#allocation7], 1
  %197 = vsyncmov [#allocation3]
  %s198 = vpop.sfrf %197
  %p199 = scmp.eq.s32.totalorder %s198, 0
  %p200 = pneg %p199
  %202 = shalt.err (%p200)
  %s203 = scalar_lea.sflag [#allocation3], 1
  %204 = vsyncmov %s203
  %s205 = vpop.sfrf %204
  %p206 = scmp.eq.s32.totalorder %s205, 0
  %p207 = pneg %p206
  %209 = shalt.err (%p207)
  %s210 = scalar_lea.sflag [#allocation3], 2
  %211 = vsyncmov %s210
  %s212 = vpop.sfrf %211
  %p213 = scmp.eq.s32.totalorder %s212, 0
  %p214 = pneg %p213
  %216 = shalt.err (%p214)
  %s217 = scalar_lea.sflag [#allocation3], 3
  %218 = vsyncmov %s217
  %s219 = vpop.sfrf %218
  %p220 = scmp.eq.s32.totalorder %s219, 0
  %p221 = pneg %p220
  %223 = shalt.err (%p221)
  %s224 = scalar_lea.sflag [#allocation3], 4
  %225 = vsyncmov %s224
  %s226 = vpop.sfrf %225
  %p227 = scmp.eq.s32.totalorder %s226, 0
  %p228 = pneg %p227
  %230 = shalt.err (%p228)
  %s231 = scalar_lea.sflag [#allocation3], 5
  %232 = vsyncmov %s231
  %s233 = vpop.sfrf %232
  %p234 = scmp.eq.s32.totalorder %s233, 0
  %p235 = pneg %p234
  %237 = shalt.err (%p235)
  %s238 = scalar_lea.sflag [#allocation3], 6
  %239 = vsyncmov %s238
  %s240 = vpop.sfrf %239
  %p241 = scmp.eq.s32.totalorder %s240, 0
  %p242 = pneg %p241
  %244 = shalt.err (%p242)
  %s245 = scalar_lea.sflag [#allocation3], 7
  %246 = vsyncmov %s245
  %s247 = vpop.sfrf %246
  %p248 = scmp.eq.s32.totalorder %s247, 0
  %p249 = pneg %p248
  %251 = shalt.err (%p249)

</llo_original>
